<compile_context>
chip_gen: v5e
topology: v5e:2x2
jax: 0.10.0
libtpu: 0.0.40
codegen_flags: <defaults>
</compile_context>

<pallas_src>
import jax
import jax.numpy as jnp
from jax.experimental import pallas as pl
from jax.experimental.pallas import tpu as pltpu


def _round_up(x, m):
    return ((x + m - 1) // m) * m


def _make_kernel(K, tile_t, halo_pad, matmul_dtype):
    def kernel(x_ref, halo_ref, wdw_ref, wpwT_ref, bias_ref, o_ref):
        # x_ref block:    (1, tile_t, Dp)          current sequence tile
        # halo_ref block: (1, 1, halo_pad, Dp)     the halo_pad rows preceding this tile
        #                                          (zeros for the first tile of each batch)
        x = x_ref[0].astype(jnp.float32)                 # cast hoisted out of the tap loop
        halo = halo_ref[0, 0].astype(jnp.float32)        # (halo_pad, Dp), sublane-aligned
        x_ext = jnp.concatenate([halo, x], axis=0)       # (halo_pad + tile_t, Dp)
        # x_ext[j] == x[t0 - halo_pad + j]  (zero outside the valid range)

        w = wdw_ref[...].astype(jnp.float32)             # (K, Dp) per-channel taps

        # Depthwise causal conv: each tap is a plain static slice of the haloed block.
        base = halo_pad - (K - 1)
        acc = x_ext[base + K - 1: base + K - 1 + tile_t, :] * w[K - 1][None, :]
        for k in range(K - 1):                           # K is small & static -> unrolled
            acc = acc + x_ext[base + k: base + k + tile_t, :] * w[k][None, :]

        # Pointwise 1x1 conv == matmul over the channel dim (MXU).
        # The depthwise bias was folded into bias_ref in the wrapper (pointwise conv is linear).
        y = jnp.dot(acc.astype(matmul_dtype), wpwT_ref[...],
                    preferred_element_type=jnp.float32)
        y = y + bias_ref[0][None, :]

        o_ref[0] = y.astype(o_ref.dtype)

    return kernel


def causal_depthwise_conv1d(x, w_dw, b_dw, w_pw, b_pw, kernel_size,
                            *, tile_t=None, matmul_dtype=None):
    """
    x:    (B, T, D)
    w_dw: (D, 1, K)  depthwise Conv1d weight (groups=D), PyTorch layout
    b_dw: (D,)
    w_pw: (D, D, 1)  pointwise Conv1d weight, PyTorch layout (out, in, 1)
    b_pw: (D,)
    matmul_dtype: operand dtype of the 1x1-conv matmul (accumulation stays f32).
                  Pass jnp.bfloat16 on v5e/v6e/v7x for 2-4x MXU throughput when the
                  precision budget allows (slightly changes numerics).
    returns (B, T, D)
    """
    B, T, D = x.shape
    K = int(kernel_size)
    out_dtype = x.dtype
    if matmul_dtype is None:
        matmul_dtype = x.dtype

    # ---- repack & fuse parameters (plain JAX glue) ----
    wdw = jnp.transpose(w_dw[:, 0, :], (1, 0)).astype(jnp.float32)    # (K, D)
    wpwT = jnp.transpose(w_pw[:, :, 0], (1, 0)).astype(jnp.float32)   # (D_in, D_out): y = acc @ wpwT
    # Fold depthwise bias through the (linear) pointwise conv: (y1 + b_dw) @ W + b_pw
    #   = y1 @ W + (b_dw @ W + b_pw)
    b_fused = b_dw.astype(jnp.float32) @ wpwT + b_pw.astype(jnp.float32)   # (D,)

    # ---- lane-dense channel padding (last dim -> multiple of 128) ----
    Dp = _round_up(D, 128)
    if Dp != D:
        x = jnp.pad(x, ((0, 0), (0, 0), (0, Dp - D)))
        wdw = jnp.pad(wdw, ((0, 0), (0, Dp - D)))
        wpwT = jnp.pad(wpwT, ((0, Dp - D), (0, Dp - D)))
        b_fused = jnp.pad(b_fused, (0, Dp - D))
    wpwT = wpwT.astype(matmul_dtype)
    bias = b_fused.reshape(1, Dp)

    # ---- sequence tiling (bounds VMEM, enables DMA pipelining + megacore sharding) ----
    halo_pad = _round_up(max(K - 1, 1), 8)           # sublane-aligned halo depth
    if tile_t is None:
        tile_t = min(512, _round_up(T, 8))           # big tiles for long T, exact fit for short T
    tile_t = max(_round_up(int(tile_t), 8), halo_pad)
    T_pad = _round_up(T, tile_t)
    n_t = T_pad // tile_t

    # Main tiles: x padded with zeros at the *end* of T only (extra rows are sliced off below).
    x_main = jnp.pad(x, ((0, 0), (0, T_pad - T), (0, 0)))            # (B, T_pad, Dp)
    # Halo rows preceding each tile, taken from the causally left-padded sequence, so the first
    # tile of every batch sees zeros (causal padding) and never rows from another batch.
    x_left = jnp.pad(x, ((0, 0), (halo_pad, T_pad - T), (0, 0)))     # (B, T_pad + halo_pad, Dp)
    halos = x_left[:, :n_t * tile_t, :].reshape(B, n_t, tile_t, Dp)[:, :, :halo_pad, :]

    kernel = _make_kernel(K, tile_t, halo_pad, matmul_dtype)
    out_shape = jax.ShapeDtypeStruct((B, T_pad, Dp), out_dtype)

    def _call(single_buffer_weights):
        # Constant-index parameter blocks: request single buffering (saves VMEM — the (Dp,Dp)
        # weight is the largest allocation on v7x's 64 MiB VMEM) — their block index never
        # changes, so they are only DMA'd once anyway.
        kw = dict(pipeline_mode=pl.Buffered(1)) if single_buffer_weights else {}
        in_specs = [
            pl.BlockSpec((1, tile_t, Dp), lambda b, t: (b, t, 0)),        # x tile
            pl.BlockSpec((1, 1, halo_pad, Dp), lambda b, t: (b, t, 0, 0)),  # halo rows
            pl.BlockSpec((K, Dp), lambda b, t: (0, 0), **kw),             # depthwise taps
            pl.BlockSpec((Dp, Dp), lambda b, t: (0, 0), **kw),            # pointwise weight^T
            pl.BlockSpec((1, Dp), lambda b, t: (0, 0), **kw),             # fused bias
        ]
        out_specs = pl.BlockSpec((1, tile_t, Dp), lambda b, t: (b, t, 0))
        return pl.pallas_call(
            kernel,
            out_shape=out_shape,
            grid_spec=pltpu.PrefetchScalarGridSpec(
                num_scalar_prefetch=0,
                grid=(B, n_t),
                in_specs=in_specs,
                out_specs=out_specs,
            ),
            compiler_params=pltpu.CompilerParams(
                dimension_semantics=("parallel", "parallel"),
                vmem_limit_bytes=64 * 1024 * 1024,   # above the 32 MiB scoped default
            ),
        )(x_main, halos, wdw, wpwT, bias)

    try:
        out = _call(True)
    except Exception:
        # Fallback for JAX versions that reject pipeline_mode=pl.Buffered(1) on these specs;
        # only costs one extra (double) buffer per weight block.
        out = _call(False)

    return out[:, :T, :D]


def _reference(x, w_dw, b_dw, w_pw, b_pw, K):
    # Pure-JAX reference reproducing the PyTorch forward exactly.
    B, T, D = x.shape
    xt = jnp.transpose(x, (0, 2, 1)).astype(jnp.float32)     # (B, D, T)
    xp = jnp.pad(xt, ((0, 0), (0, 0), (K - 1, 0)))           # causal left pad
    y1 = jnp.zeros((B, D, T), jnp.float32)
    for k in range(K):                                       # depthwise conv, groups = D
        y1 = y1 + xp[:, :, k:k + T] * w_dw[:, 0, k][None, :, None]
    y1 = y1 + b_dw[None, :, None]
    y = jnp.einsum('cd,bdt->bct', w_pw[:, :, 0], y1) + b_pw[None, :, None]   # 1x1 conv
    return jnp.transpose(y, (0, 2, 1)).astype(x.dtype)       # (B, T, D)


if __name__ == "__main__":
    configs = [
        # (B, T, D, K, tile_t)
        (2, 8, 32, 3, None),    # small shape matching the module interface
        (2, 40, 32, 3, 16),     # multi-tile sequence: tests halo across tiles + T remainder pad
        (1, 24, 48, 1, 8),      # kernel_size == 1 (degenerate depthwise) + non-pow2 channels
    ]
    for (B, T, D, K, tile_t) in configs:
        key = jax.random.PRNGKey(0)
        k1, k2, k3, k4, k5 = jax.random.split(key, 5)

        x = jax.random.normal(k1, (B, T, D), dtype=jnp.float32)
        # Deterministic synthetic params with the PyTorch module's shapes.
        w_dw = jax.random.normal(k2, (D, 1, K), dtype=jnp.float32) * 0.2   # Conv1d(D, D, K, groups=D)
        b_dw = jax.random.normal(k3, (D,), dtype=jnp.float32) * 0.1
        w_pw = jax.random.normal(k4, (D, D, 1), dtype=jnp.float32) * 0.1   # Conv1d(D, D, 1)
        b_pw = jax.random.normal(k5, (D,), dtype=jnp.float32) * 0.1

        out = causal_depthwise_conv1d(x, w_dw, b_dw, w_pw, b_pw, K, tile_t=tile_t)
        out = jax.block_until_ready(out)

        ref = _reference(x, w_dw, b_dw, w_pw, b_pw, K)
        assert out.shape == (B, T, D)
        assert jnp.allclose(out, ref, atol=1e-4, rtol=1e-4), \
            f"mismatch vs reference for config {(B, T, D, K, tile_t)}"

    print("KERNEL_OK")
</pallas_src>

<mosaic_0001>
module attributes {stable_mosaic.version = 11 : i64} {
  func.func @kernel(%arg0: i32, %arg1: i32, %arg2: memref<1x8x128xf32, #tpu.memory_space<vmem>>, %arg3: memref<1x1x8x128xf32, #tpu.memory_space<vmem>>, %arg4: memref<3x128xf32, #tpu.memory_space<vmem>>, %arg5: memref<128x128xf32, #tpu.memory_space<vmem>>, %arg6: memref<1x128xf32, #tpu.memory_space<vmem>>, %arg7: memref<1x8x128xf32, #tpu.memory_space<vmem>>) attributes {dimension_semantics = [#tpu.dimension_semantics<parallel>, #tpu.dimension_semantics<parallel>], iteration_bounds = array<i64: 2, 1>, scalar_prefetch = 0 : i64, scratch_operands = 0 : i64, tpu.core_type = #tpu.core_type<tc>, window_params = [{transform_indices = @transform_0, window_bounds = array<i64: 1, 8, 128>}, {transform_indices = @transform_1, window_bounds = array<i64: 1, 1, 8, 128>}, {pipeline_mode = #tpu.pipeline_mode<synchronous>, transform_indices = @transform_2, window_bounds = array<i64: 3, 128>}, {pipeline_mode = #tpu.pipeline_mode<synchronous>, transform_indices = @transform_3, window_bounds = array<i64: 128, 128>}, {pipeline_mode = #tpu.pipeline_mode<synchronous>, transform_indices = @transform_4, window_bounds = array<i64: 1, 128>}, {transform_indices = @transform_5, window_bounds = array<i64: 1, 8, 128>}]} {
    %c0 = arith.constant 0 : index
    %c0_0 = arith.constant 0 : index
    %c0_1 = arith.constant 0 : index
    %0 = vector.load %arg2[%c0, %c0_0, %c0_1] : memref<1x8x128xf32, #tpu.memory_space<vmem>>, vector<1x8x128xf32>
    %1 = vector.shape_cast %0 : vector<1x8x128xf32> to vector<8x128xf32>
    %c0_2 = arith.constant 0 : index
    %c0_3 = arith.constant 0 : index
    %c0_4 = arith.constant 0 : index
    %c0_5 = arith.constant 0 : index
    %2 = vector.load %arg3[%c0_2, %c0_3, %c0_4, %c0_5] : memref<1x1x8x128xf32, #tpu.memory_space<vmem>>, vector<1x1x8x128xf32>
    %3 = vector.shape_cast %2 : vector<1x1x8x128xf32> to vector<8x128xf32>
    %4 = tpu.concatenate %3, %1 in 0 : vector<8x128xf32>, vector<8x128xf32> -> vector<16x128xf32>
    %c0_6 = arith.constant 0 : index
    %c0_7 = arith.constant 0 : index
    %5 = vector.load %arg4[%c0_6, %c0_7] : memref<3x128xf32, #tpu.memory_space<vmem>>, vector<3x128xf32>
    %6 = vector.extract_strided_slice %4 {offsets = [8, 0], sizes = [8, 128], strides = [1, 1]} : vector<16x128xf32> to vector<8x128xf32>
    %7 = vector.extract_strided_slice %5 {offsets = [2, 0], sizes = [1, 128], strides = [1, 1]} : vector<3x128xf32> to vector<1x128xf32>
    %8 = vector.shape_cast %7 : vector<1x128xf32> to vector<128xf32>
    %9 = vector.shape_cast %8 : vector<128xf32> to vector<1x128xf32>
    %10 = vector.broadcast %9 : vector<1x128xf32> to vector<8x128xf32>
    %11 = arith.mulf %6, %10 : vector<8x128xf32>
    %12 = vector.extract_strided_slice %4 {offsets = [6, 0], sizes = [8, 128], strides = [1, 1]} : vector<16x128xf32> to vector<8x128xf32>
    %13 = vector.extract_strided_slice %5 {offsets = [0, 0], sizes = [1, 128], strides = [1, 1]} : vector<3x128xf32> to vector<1x128xf32>
    %14 = vector.shape_cast %13 : vector<1x128xf32> to vector<128xf32>
    %15 = vector.shape_cast %14 : vector<128xf32> to vector<1x128xf32>
    %16 = vector.broadcast %15 : vector<1x128xf32> to vector<8x128xf32>
    %17 = arith.mulf %12, %16 : vector<8x128xf32>
    %18 = arith.addf %11, %17 : vector<8x128xf32>
    %19 = vector.extract_strided_slice %4 {offsets = [7, 0], sizes = [8, 128], strides = [1, 1]} : vector<16x128xf32> to vector<8x128xf32>
    %20 = vector.extract_strided_slice %5 {offsets = [1, 0], sizes = [1, 128], strides = [1, 1]} : vector<3x128xf32> to vector<1x128xf32>
    %21 = vector.shape_cast %20 : vector<1x128xf32> to vector<128xf32>
    %22 = vector.shape_cast %21 : vector<128xf32> to vector<1x128xf32>
    %23 = vector.broadcast %22 : vector<1x128xf32> to vector<8x128xf32>
    %24 = arith.mulf %19, %23 : vector<8x128xf32>
    %25 = arith.addf %18, %24 : vector<8x128xf32>
    %c0_8 = arith.constant 0 : index
    %c0_9 = arith.constant 0 : index
    %26 = vector.load %arg5[%c0_8, %c0_9] : memref<128x128xf32, #tpu.memory_space<vmem>>, vector<128x128xf32>
    %cst = arith.constant dense<0.000000e+00> : vector<8x128xf32>
    %27 = tpu.matmul %25, %26, %cst {dimension_numbers = #tpu.dot_dimension_numbers<[1], [0], [0], [1], [0, 0, 1, 1], [], []>} : vector<8x128xf32>, vector<128x128xf32>, vector<8x128xf32> -> vector<8x128xf32>
    %c0_10 = arith.constant 0 : index
    %c0_11 = arith.constant 0 : index
    %28 = vector.load %arg6[%c0_10, %c0_11] : memref<1x128xf32, #tpu.memory_space<vmem>>, vector<1x128xf32>
    %29 = vector.shape_cast %28 : vector<1x128xf32> to vector<128xf32>
    %30 = vector.shape_cast %29 : vector<128xf32> to vector<1x128xf32>
    %31 = vector.broadcast %30 : vector<1x128xf32> to vector<8x128xf32>
    %32 = arith.addf %27, %31 : vector<8x128xf32>
    %c0_12 = arith.constant 0 : index
    %c0_13 = arith.constant 0 : index
    %c0_14 = arith.constant 0 : index
    %33 = vector.load %arg7[%c0_12, %c0_13, %c0_14] : memref<1x8x128xf32, #tpu.memory_space<vmem>>, vector<1x8x128xf32>
    %34 = vector.shape_cast %33 : vector<1x8x128xf32> to vector<8x128xf32>
    %35 = vector.shape_cast %32 : vector<8x128xf32> to vector<1x8x128xf32>
    tpu.vector_store %arg7[%c0_12, %c0_13, %c0_14], %35 {strides = array<i32>} : memref<1x8x128xf32, #tpu.memory_space<vmem>>, vector<1x8x128xf32>,
    return
  }
  func.func @transform_0(%arg0: i32, %arg1: i32) -> (i32, i32, i32) {
    %c0_i32 = arith.constant 0 : i32
    %c0_i32_0 = arith.constant 0 : i32
    return %arg0, %arg1, %c0_i32 : i32, i32, i32
  }
  func.func @transform_1(%arg0: i32, %arg1: i32) -> (i32, i32, i32, i32) {
    %c0_i32 = arith.constant 0 : i32
    %c0_i32_0 = arith.constant 0 : i32
    %c0_i32_1 = arith.constant 0 : i32
    return %arg0, %arg1, %c0_i32, %c0_i32_0 : i32, i32, i32, i32
  }
  func.func @transform_2(%arg0: i32, %arg1: i32) -> (i32, i32) {
    %c0_i32 = arith.constant 0 : i32
    %c0_i32_0 = arith.constant 0 : i32
    %c0_i32_1 = arith.constant 0 : i32
    return %c0_i32, %c0_i32_0 : i32, i32
  }
  func.func @transform_3(%arg0: i32, %arg1: i32) -> (i32, i32) {
    %c0_i32 = arith.constant 0 : i32
    %c0_i32_0 = arith.constant 0 : i32
    %c0_i32_1 = arith.constant 0 : i32
    return %c0_i32, %c0_i32_0 : i32, i32
  }
  func.func @transform_4(%arg0: i32, %arg1: i32) -> (i32, i32) {
    %c0_i32 = arith.constant 0 : i32
    %c0_i32_0 = arith.constant 0 : i32
    %c0_i32_1 = arith.constant 0 : i32
    return %c0_i32, %c0_i32_0 : i32, i32
  }
  func.func @transform_5(%arg0: i32, %arg1: i32) -> (i32, i32, i32) {
    %c0_i32 = arith.constant 0 : i32
    %c0_i32_0 = arith.constant 0 : i32
    return %arg0, %arg1, %c0_i32 : i32, i32, i32
  }
}

module attributes {stable_mosaic.version = 11 : i64} {
  func.func @kernel(%arg0: i32, %arg1: i32, %arg2: memref<1x8x128xf32, #tpu.memory_space<vmem>>, %arg3: memref<1x1x8x128xf32, #tpu.memory_space<vmem>>, %arg4: memref<3x128xf32, #tpu.memory_space<vmem>>, %arg5: memref<128x128xf32, #tpu.memory_space<vmem>>, %arg6: memref<1x128xf32, #tpu.memory_space<vmem>>, %arg7: memref<1x8x128xf32, #tpu.memory_space<vmem>>) attributes {dimension_semantics = [#tpu.dimension_semantics<parallel>, #tpu.dimension_semantics<parallel>], iteration_bounds = array<i64: 2, 1>, scalar_prefetch = 0 : i64, scratch_operands = 0 : i64, tpu.core_type = #tpu.core_type<tc>, window_params = [{transform_indices = @transform_0, window_bounds = array<i64: 1, 8, 128>}, {transform_indices = @transform_1, window_bounds = array<i64: 1, 1, 8, 128>}, {pipeline_mode = #tpu.pipeline_mode<synchronous>, transform_indices = @transform_2, window_bounds = array<i64: 3, 128>}, {pipeline_mode = #tpu.pipeline_mode<synchronous>, transform_indices = @transform_3, window_bounds = array<i64: 128, 128>}, {pipeline_mode = #tpu.pipeline_mode<synchronous>, transform_indices = @transform_4, window_bounds = array<i64: 1, 128>}, {transform_indices = @transform_5, window_bounds = array<i64: 1, 8, 128>}]} {
    %c0 = arith.constant 0 : index
    %c0_0 = arith.constant 0 : index
    %c0_1 = arith.constant 0 : index
    %0 = vector.load %arg2[%c0, %c0_0, %c0_1] : memref<1x8x128xf32, #tpu.memory_space<vmem>>, vector<1x8x128xf32>
    %1 = vector.shape_cast %0 : vector<1x8x128xf32> to vector<8x128xf32>
    %c0_2 = arith.constant 0 : index
    %c0_3 = arith.constant 0 : index
    %c0_4 = arith.constant 0 : index
    %c0_5 = arith.constant 0 : index
    %2 = vector.load %arg3[%c0_2, %c0_3, %c0_4, %c0_5] : memref<1x1x8x128xf32, #tpu.memory_space<vmem>>, vector<1x1x8x128xf32>
    %3 = vector.shape_cast %2 : vector<1x1x8x128xf32> to vector<8x128xf32>
    %4 = tpu.concatenate %3, %1 in 0 : vector<8x128xf32>, vector<8x128xf32> -> vector<16x128xf32>
    %c0_6 = arith.constant 0 : index
    %c0_7 = arith.constant 0 : index
    %5 = vector.load %arg4[%c0_6, %c0_7] : memref<3x128xf32, #tpu.memory_space<vmem>>, vector<3x128xf32>
    %6 = vector.extract_strided_slice %4 {offsets = [8, 0], sizes = [8, 128], strides = [1, 1]} : vector<16x128xf32> to vector<8x128xf32>
    %7 = vector.extract_strided_slice %5 {offsets = [2, 0], sizes = [1, 128], strides = [1, 1]} : vector<3x128xf32> to vector<1x128xf32>
    %8 = vector.shape_cast %7 : vector<1x128xf32> to vector<128xf32>
    %9 = vector.shape_cast %8 : vector<128xf32> to vector<1x128xf32>
    %10 = vector.broadcast %9 : vector<1x128xf32> to vector<8x128xf32>
    %11 = arith.mulf %6, %10 : vector<8x128xf32>
    %12 = vector.extract_strided_slice %4 {offsets = [6, 0], sizes = [8, 128], strides = [1, 1]} : vector<16x128xf32> to vector<8x128xf32>
    %13 = vector.extract_strided_slice %5 {offsets = [0, 0], sizes = [1, 128], strides = [1, 1]} : vector<3x128xf32> to vector<1x128xf32>
    %14 = vector.shape_cast %13 : vector<1x128xf32> to vector<128xf32>
    %15 = vector.shape_cast %14 : vector<128xf32> to vector<1x128xf32>
    %16 = vector.broadcast %15 : vector<1x128xf32> to vector<8x128xf32>
    %17 = arith.mulf %12, %16 : vector<8x128xf32>
    %18 = arith.addf %11, %17 : vector<8x128xf32>
    %19 = vector.extract_strided_slice %4 {offsets = [7, 0], sizes = [8, 128], strides = [1, 1]} : vector<16x128xf32> to vector<8x128xf32>
    %20 = vector.extract_strided_slice %5 {offsets = [1, 0], sizes = [1, 128], strides = [1, 1]} : vector<3x128xf32> to vector<1x128xf32>
    %21 = vector.shape_cast %20 : vector<1x128xf32> to vector<128xf32>
    %22 = vector.shape_cast %21 : vector<128xf32> to vector<1x128xf32>
    %23 = vector.broadcast %22 : vector<1x128xf32> to vector<8x128xf32>
    %24 = arith.mulf %19, %23 : vector<8x128xf32>
    %25 = arith.addf %18, %24 : vector<8x128xf32>
    %c0_8 = arith.constant 0 : index
    %c0_9 = arith.constant 0 : index
    %26 = vector.load %arg5[%c0_8, %c0_9] : memref<128x128xf32, #tpu.memory_space<vmem>>, vector<128x128xf32>
    %cst = arith.constant dense<0.000000e+00> : vector<8x128xf32>
    %27 = tpu.matmul %25, %26, %cst {dimension_numbers = #tpu.dot_dimension_numbers<[1], [0], [0], [1], [0, 0, 1, 1], [], []>} : vector<8x128xf32>, vector<128x128xf32>, vector<8x128xf32> -> vector<8x128xf32>
    %c0_10 = arith.constant 0 : index
    %c0_11 = arith.constant 0 : index
    %28 = vector.load %arg6[%c0_10, %c0_11] : memref<1x128xf32, #tpu.memory_space<vmem>>, vector<1x128xf32>
    %29 = vector.shape_cast %28 : vector<1x128xf32> to vector<128xf32>
    %30 = vector.shape_cast %29 : vector<128xf32> to vector<1x128xf32>
    %31 = vector.broadcast %30 : vector<1x128xf32> to vector<8x128xf32>
    %32 = arith.addf %27, %31 : vector<8x128xf32>
    %c0_12 = arith.constant 0 : index
    %c0_13 = arith.constant 0 : index
    %c0_14 = arith.constant 0 : index
    %33 = vector.load %arg7[%c0_12, %c0_13, %c0_14] : memref<1x8x128xf32, #tpu.memory_space<vmem>>, vector<1x8x128xf32>
    %34 = vector.shape_cast %33 : vector<1x8x128xf32> to vector<8x128xf32>
    %35 = vector.shape_cast %32 : vector<8x128xf32> to vector<1x8x128xf32>
    tpu.vector_store %arg7[%c0_12, %c0_13, %c0_14], %35 {strides = array<i32>} : memref<1x8x128xf32, #tpu.memory_space<vmem>>, vector<1x8x128xf32>,
    return
  }
  func.func @transform_0(%arg0: i32, %arg1: i32) -> (i32, i32, i32) {
    %c0_i32 = arith.constant 0 : i32
    %c0_i32_0 = arith.constant 0 : i32
    return %arg0, %arg1, %c0_i32 : i32, i32, i32
  }
  func.func @transform_1(%arg0: i32, %arg1: i32) -> (i32, i32, i32, i32) {
    %c0_i32 = arith.constant 0 : i32
    %c0_i32_0 = arith.constant 0 : i32
    %c0_i32_1 = arith.constant 0 : i32
    return %arg0, %arg1, %c0_i32, %c0_i32_0 : i32, i32, i32, i32
  }
  func.func @transform_2(%arg0: i32, %arg1: i32) -> (i32, i32) {
    %c0_i32 = arith.constant 0 : i32
    %c0_i32_0 = arith.constant 0 : i32
    %c0_i32_1 = arith.constant 0 : i32
    return %c0_i32, %c0_i32_0 : i32, i32
  }
  func.func @transform_3(%arg0: i32, %arg1: i32) -> (i32, i32) {
    %c0_i32 = arith.constant 0 : i32
    %c0_i32_0 = arith.constant 0 : i32
    %c0_i32_1 = arith.constant 0 : i32
    return %c0_i32, %c0_i32_0 : i32, i32
  }
  func.func @transform_4(%arg0: i32, %arg1: i32) -> (i32, i32) {
    %c0_i32 = arith.constant 0 : i32
    %c0_i32_0 = arith.constant 0 : i32
    %c0_i32_1 = arith.constant 0 : i32
    return %c0_i32, %c0_i32_0 : i32, i32
  }
  func.func @transform_5(%arg0: i32, %arg1: i32) -> (i32, i32, i32) {
    %c0_i32 = arith.constant 0 : i32
    %c0_i32_0 = arith.constant 0 : i32
    return %arg0, %arg1, %c0_i32 : i32, i32, i32
  }
}

</mosaic_0001>

<llo_original>
// kernel: tpu_custom_call.1
$region0: #{tpu_custom_call.1}
  #allocation0 [shape = 'u32[]', space=smem, size = 0x4, offset = 0x4, fixed_abs, tag = 'smem constant byte address 0x4 - core index']
  #allocation1 [shape = 'u32[72,128]{1,0:T(1,128)}', space=vmem, size = 0x9000, scoped, tag = 'internal scratch']
  %s0 = inlined_call_operand.hbm [shape: f32[2,8,128], index: 0, kind: input, shape index: {}]
  %s1 = inlined_call_operand.hbm [shape: f32[2,1,8,128], index: 1, kind: input, shape index: {}]
  %s2 = inlined_call_operand.hbm [shape: f32[3,128], index: 2, kind: input, shape index: {}]
  %s3 = inlined_call_operand.hbm [shape: f32[128,128], index: 3, kind: input, shape index: {}]
  %s4 = inlined_call_operand.vmem [shape: f32[1,128], index: 4, kind: input, shape index: {}]
  %s5 = inlined_call_operand.hbm [shape: f32[2,8,128], index: 5, kind: output, shape index: {}]
  %s6 = sld [smem:[#allocation0]]
  $region69: #{tpu_custom_call.1} parent=0
    _
  %s8 = ssub.s32 1, %s6
  %s9 = scalar_select 0, %s8, %s6
  $region1: #{tpu_custom_call.1} parent=0
    #allocation2 [shape = 'u8[8192]{0}', space=vmem, size = 0x2000, scoped, tag = 'input window, operand 0']
    #allocation3 [shape = 's32[2]{0}', space=sflag, size = 0x8, scoped, tag = 'scoped memory for tpu_custom_call.1']
    #allocation4 [shape = 's32[2]{0}', space=sflag, size = 0x8, scoped, tag = 'scoped memory for tpu_custom_call.1']
    #allocation5 [shape = 'u8[8192]{0}', space=vmem, size = 0x2000, scoped, tag = 'input window, operand 1']
    #allocation6 [shape = 's32[2]{0}', space=sflag, size = 0x8, scoped, tag = 'scoped memory for tpu_custom_call.1']
    #allocation7 [shape = 'u8[2048]{0}', space=vmem, size = 0x800, scoped, tag = 'input window, operand 2, single buffered']
    #allocation8 [shape = 'u8[65536]{0}', space=vmem, size = 0x10000, scoped, tag = 'input window, operand 3, single buffered']
    #allocation9 [shape = 's32[1]{0}', space=sflag, size = 0x4, scoped, tag = 'scoped memory for tpu_custom_call.1']
    #allocation10 [shape = 'u8[8192]{0}', space=vmem, size = 0x2000, scoped, tag = 'output window, operand 0']
    %10 = vsyncpa [#allocation3], 0
    %s11 = scalar_lea.sflag [#allocation3], 1
    %12 = vsyncpa %s11, 0
    %13 = vsyncpa [#allocation6], 0
    %s14 = scalar_lea.sflag [#allocation6], 1
    %15 = vsyncpa %s14, 0
    %16 = vsyncpa [#allocation9], 0
    %17 = vsyncpa [#allocation4], 0
    %s18 = scalar_lea.sflag [#allocation4], 1
    %19 = vsyncpa %s18, 0
    loop: start=0, step=1, limit=4
    $region2: #{tpu_custom_call.1} parent=1 // loop_pre_header
      _
    $region3: #{tpu_custom_call.1} parent=1 // loop_header
      %s21 = sphi 0, %s25
      %p22 = scmp.ge.s32.totalorder %s21, 4
      %s28 = sphi 0, %s40
      %s29 = sphi 0, %s36
      %s30 = sphi 0, %s28
      %s31 = sphi 0, %s29
      %s32 = sphi 0, %s30
      %s33 = sphi 0, %s31
      %s45 = sphi 0, %s47
      %s48 = sphi 0, %s45
      %s49 = sphi 0, %s48
      %s65 = sphi 0, %s49
      %s73 = sphi 0, %s75
      %s76 = sphi 0, %s73
      %s77 = sphi 0, %s76
      %s93 = sphi 0, %s77
      %s97 = sphi 0, %s97
      %s99 = sphi 0, %s97
      %s100 = sphi 0, %s99
      %s114 = sphi 0, %s100
      %s118 = sphi 0, %s118
      %s120 = sphi 0, %s118
      %s121 = sphi 0, %s120
      %s135 = sphi 0, %s121
      %s139 = sphi 0, %s139
      %s141 = sphi 0, %s139
      %s142 = sphi 0, %s141
      %s156 = sphi 0, %s142
      %s164 = sphi 0, %s166
      %s167 = sphi 0, %s164
      %s168 = sphi 0, %s167
      %s184 = sphi 0, %s168
    $region4: #{tpu_custom_call.1} parent=1 // loop_header_branch
      %24 = sbr.rel (%p22) target = $region8
    $region5: #{tpu_custom_call.1} parent=1 // loop_body
      %s26 = ssub.s32 %s21, 1
      %s27 = ssub.s32 %s21, 2
      %s34 = sadd.s32 1, %s29
      %p35 = scmp.ge.s32.totalorder %s34, 1
      %s36 = scalar_select %p35, 0, %s34
      %s37 = sadd.s32 1, %s28
      %s38 = scalar_select %p35, %s37, %s28
      %p39 = scmp.ge.s32.totalorder %s38, 2
      %s40 = scalar_select %p39, 0, %s38
      %s41 = ssub.s32 %s28, %s40
      %s42 = ssub.s32 %s29, %s36
      %s43 = sor.u32 %s41, %s42
      %p44 = scmp.eq.s32.totalorder %s43, 0
      %s46 = sadd.s32 %s45, 1
      %s47 = scalar_select %p44, %s45, %s46
      %p50 = pneg %p44
      %p51 = scmp.eq.s32.totalorder %s21, 1
      %p52 = por %p50, %p51
      %p53 = scmp.ne.s32.totalorder %s45, %s48
      %p54 = scmp.eq.s32.totalorder %s21, 0
      %p55 = por %p53, %p54
      %p56 = scmp.ne.s32.totalorder %s45, %s48
      %p57 = scmp.eq.s32.totalorder %s26, 1
      %p58 = por %p56, %p57
      %p59 = scmp.ne.s32.totalorder %s48, %s49
      %p60 = scmp.eq.s32.totalorder %s26, 0
      %p61 = por %p59, %p60
      %p62 = scmp.ne.s32.totalorder %s48, %s49
      %p63 = scmp.eq.s32.totalorder %s27, 1
      %p64 = por %p62, %p63
      %p66 = scmp.ne.s32.totalorder %s49, %s65
      %p67 = scmp.eq.s32.totalorder %s27, 0
      %p68 = por %p66, %p67
      %s69 = ssub.s32 %s28, %s40
      %s70 = ssub.s32 %s29, %s36
      %s71 = sor.u32 %s69, %s70
      %p72 = scmp.eq.s32.totalorder %s71, 0
      %s74 = sadd.s32 %s73, 1
      %s75 = scalar_select %p72, %s73, %s74
      %p78 = pneg %p72
      %p79 = scmp.eq.s32.totalorder %s21, 1
      %p80 = por %p78, %p79
      %p81 = scmp.ne.s32.totalorder %s73, %s76
      %p82 = scmp.eq.s32.totalorder %s21, 0
      %p83 = por %p81, %p82
      %p84 = scmp.ne.s32.totalorder %s73, %s76
      %p85 = scmp.eq.s32.totalorder %s26, 1
      %p86 = por %p84, %p85
      %p87 = scmp.ne.s32.totalorder %s76, %s77
      %p88 = scmp.eq.s32.totalorder %s26, 0
      %p89 = por %p87, %p88
      %p90 = scmp.ne.s32.totalorder %s76, %s77
      %p91 = scmp.eq.s32.totalorder %s27, 1
      %p92 = por %p90, %p91
      %p94 = scmp.ne.s32.totalorder %s77, %s93
      %p95 = scmp.eq.s32.totalorder %s27, 0
      %p96 = por %p94, %p95
      %s98 = sadd.s32 %s97, 1
      %p101 = scmp.eq.s32.totalorder %s21, 1
      %p102 = scmp.ne.s32.totalorder %s97, %s99
      %p103 = scmp.eq.s32.totalorder %s21, 0
      %p104 = por %p102, %p103
      %p105 = scmp.ne.s32.totalorder %s97, %s99
      %p106 = scmp.eq.s32.totalorder %s26, 1
      %p107 = por %p105, %p106
      %p108 = scmp.ne.s32.totalorder %s99, %s100
      %p109 = scmp.eq.s32.totalorder %s26, 0
      %p110 = por %p108, %p109
      %p111 = scmp.ne.s32.totalorder %s99, %s100
      %p112 = scmp.eq.s32.totalorder %s27, 1
      %p113 = por %p111, %p112
      %p115 = scmp.ne.s32.totalorder %s100, %s114
      %p116 = scmp.eq.s32.totalorder %s27, 0
      %p117 = por %p115, %p116
      %s119 = sadd.s32 %s118, 1
      %p122 = scmp.eq.s32.totalorder %s21, 1
      %p123 = scmp.ne.s32.totalorder %s118, %s120
      %p124 = scmp.eq.s32.totalorder %s21, 0
      %p125 = por %p123, %p124
      %p126 = scmp.ne.s32.totalorder %s118, %s120
      %p127 = scmp.eq.s32.totalorder %s26, 1
      %p128 = por %p126, %p127
      %p129 = scmp.ne.s32.totalorder %s120, %s121
      %p130 = scmp.eq.s32.totalorder %s26, 0
      %p131 = por %p129, %p130
      %p132 = scmp.ne.s32.totalorder %s120, %s121
      %p133 = scmp.eq.s32.totalorder %s27, 1
      %p134 = por %p132, %p133
      %p136 = scmp.ne.s32.totalorder %s121, %s135
      %p137 = scmp.eq.s32.totalorder %s27, 0
      %p138 = por %p136, %p137
      %s140 = sadd.s32 %s139, 1
      %p143 = scmp.eq.s32.totalorder %s21, 1
      %p144 = scmp.ne.s32.totalorder %s139, %s141
      %p145 = scmp.eq.s32.totalorder %s21, 0
      %p146 = por %p144, %p145
      %p147 = scmp.ne.s32.totalorder %s139, %s141
      %p148 = scmp.eq.s32.totalorder %s26, 1
      %p149 = por %p147, %p148
      %p150 = scmp.ne.s32.totalorder %s141, %s142
      %p151 = scmp.eq.s32.totalorder %s26, 0
      %p152 = por %p150, %p151
      %p153 = scmp.ne.s32.totalorder %s141, %s142
      %p154 = scmp.eq.s32.totalorder %s27, 1
      %p155 = por %p153, %p154
      %p157 = scmp.ne.s32.totalorder %s142, %s156
      %p158 = scmp.eq.s32.totalorder %s27, 0
      %p159 = por %p157, %p158
      %s160 = ssub.s32 %s28, %s40
      %s161 = ssub.s32 %s29, %s36
      %s162 = sor.u32 %s160, %s161
      %p163 = scmp.eq.s32.totalorder %s162, 0
      %s165 = sadd.s32 %s164, 1
      %s166 = scalar_select %p163, %s164, %s165
      %p169 = pneg %p163
      %p170 = scmp.eq.s32.totalorder %s21, 1
      %p171 = por %p169, %p170
      %p172 = scmp.ne.s32.totalorder %s164, %s167
      %p173 = scmp.eq.s32.totalorder %s21, 0
      %p174 = por %p172, %p173
      %p175 = scmp.ne.s32.totalorder %s164, %s167
      %p176 = scmp.eq.s32.totalorder %s26, 1
      %p177 = por %p175, %p176
      %p178 = scmp.ne.s32.totalorder %s167, %s168
      %p179 = scmp.eq.s32.totalorder %s26, 0
      %p180 = por %p178, %p179
      %p181 = scmp.ne.s32.totalorder %s167, %s168
      %p182 = scmp.eq.s32.totalorder %s27, 1
      %p183 = por %p181, %p182
      %p185 = scmp.ne.s32.totalorder %s168, %s184
      %p186 = scmp.eq.s32.totalorder %s27, 0
      %p187 = por %p185, %p186
      %p188 = scmp.le.s32.totalorder 1, %s21
      %p189 = scmp.lt.s32.totalorder %s21, 3
      %p190 = pnand %p188, %p189
      %p191 = pneg %p190
      // Predicated region
      $region9: #{tpu_custom_call.1} parent=5 // pred_check
        _
      $region10: #{tpu_custom_call.1} parent=5 // pred_check_branch
        %193 = sbr.rel (%p190) target = $region12
      $region11: #{tpu_custom_call.1} parent=5 // pred_region
        %s194 = ssub.s32 %s21, 1
        // Predicated region
        $region13: #{tpu_custom_call.1} parent=11 // pred_check
          %p195 = pneg %p110
        $region14: #{tpu_custom_call.1} parent=11 // pred_check_branch
          %197 = sbr.rel (%p195) target = $region16
        $region15: #{tpu_custom_call.1} parent=11 // pred_region
          %199 = vsyncadd [#allocation6], 0
          %s201 = sshll.u32 %s2, 4
          %s202 = int_to_ptr.hbm [resolvable:$true] %s201
          %s203 = sshll.u32 [#allocation7], 4
          %s204 = int_to_ptr.vmem [resolvable:$true] %s203
          %206 = dma.hbm_to_vmem [thread:$0]  %s202, 64, %s204, [#allocation6]
        $region16: #{tpu_custom_call.1} parent=11 // pred_fallthru
          _
        // Predicated region
        $region17: #{tpu_custom_call.1} parent=11 // pred_check
          %p207 = pneg %p131
        $region18: #{tpu_custom_call.1} parent=11 // pred_check_branch
          %209 = sbr.rel (%p207) target = $region20
        $region19: #{tpu_custom_call.1} parent=11 // pred_region
          %211 = vsyncadd [#allocation9], 0
          %s212 = sshll.u32 %s3, 4
          %s213 = int_to_ptr.hbm [resolvable:$true] %s212
          %s214 = sshll.u32 [#allocation8], 4
          %s215 = int_to_ptr.vmem [resolvable:$true] %s214
          %220 = dma.hbm_to_vmem [thread:$0]  %s213, 2048, %s215, [#allocation9], 128, 128, 8
        $region20: #{tpu_custom_call.1} parent=11 // pred_fallthru
          _
        // Predicated region
        $region21: #{tpu_custom_call.1} parent=11 // pred_check
          %p221 = pneg %p152
        $region22: #{tpu_custom_call.1} parent=11 // pred_check_branch
          %223 = sbr.rel (%p221) target = $region24
        $region23: #{tpu_custom_call.1} parent=11 // pred_region
          _
        $region24: #{tpu_custom_call.1} parent=11 // pred_fallthru
          _
      $region12: #{tpu_custom_call.1} parent=5 // pred_fallthru
        _
      %p224 = scmp.lt.s32.totalorder %s21, 2
      // Predicated region
      $region25: #{tpu_custom_call.1} parent=5 // pred_check
        %p225 = pneg %p224
      $region26: #{tpu_custom_call.1} parent=5 // pred_check_branch
        %227 = sbr.rel (%p225) target = $region28
      $region27: #{tpu_custom_call.1} parent=5 // pred_region
        // Predicated region
        $region29: #{tpu_custom_call.1} parent=27 // pred_check
          %p228 = pneg %p55
        $region30: #{tpu_custom_call.1} parent=27 // pred_check_branch
          %230 = sbr.rel (%p228) target = $region32
        $region31: #{tpu_custom_call.1} parent=27 // pred_region
          %s231 = sand.u32 %s45, 1
          %s232 = scalar_lea.sflag [#allocation3], %s231
          %s233 = sand.u32 %s45, 1
          %s234 = smul.addr %s233, 8
          %s235 = scalar_lea.vmem [#allocation2], %s234
          %237 = vsyncadd %s232, 0
          %s238 = sadd.s32 %s29, %s28
          %s239 = smul.addr %s238, 8
          %s240 = scalar_lea.hbm %s0, %s239
          %s242 = sshll.u32 %s240, 4
          %s243 = int_to_ptr.hbm [resolvable:$true] %s242
          %s244 = sshll.u32 %s235, 4
          %s245 = int_to_ptr.vmem [resolvable:$true] %s244
          %247 = dma.hbm_to_vmem [thread:$0]  %s243, 128, %s245, %s232
        $region32: #{tpu_custom_call.1} parent=27 // pred_fallthru
          _
        // Predicated region
        $region33: #{tpu_custom_call.1} parent=27 // pred_check
          %p248 = pneg %p83
        $region34: #{tpu_custom_call.1} parent=27 // pred_check_branch
          %250 = sbr.rel (%p248) target = $region36
        $region35: #{tpu_custom_call.1} parent=27 // pred_region
          %s251 = sand.u32 %s21, 1
          %s252 = scalar_lea.sflag [#allocation6], %s251
          %s253 = sand.u32 %s73, 1
          %s254 = smul.addr %s253, 8
          %s255 = scalar_lea.vmem [#allocation5], %s254
          %257 = vsyncadd %s252, 0
          %s258 = sadd.s32 %s29, %s28
          %s259 = smul.addr %s258, 8
          %s260 = scalar_lea.hbm %s1, %s259
          %s262 = sshll.u32 %s260, 4
          %s263 = int_to_ptr.hbm [resolvable:$true] %s262
          %s264 = sshll.u32 %s255, 4
          %s265 = int_to_ptr.vmem [resolvable:$true] %s264
          %267 = dma.hbm_to_vmem [thread:$0]  %s263, 128, %s265, %s252
        $region36: #{tpu_custom_call.1} parent=27 // pred_fallthru
          _
      $region28: #{tpu_custom_call.1} parent=5 // pred_fallthru
        _
      %p268 = scmp.le.s32.totalorder 1, %s21
      %p269 = scmp.lt.s32.totalorder %s21, 3
      %p270 = pnand %p268, %p269
      %p271 = pneg %p270
      // Predicated region
      $region37: #{tpu_custom_call.1} parent=5 // pred_check
        _
      $region38: #{tpu_custom_call.1} parent=5 // pred_check_branch
        %273 = sbr.rel (%p270) target = $region40
      $region39: #{tpu_custom_call.1} parent=5 // pred_region
        %s274 = ssub.s32 %s21, 1
        %s275 = sand.u32 %s48, 1
        %s276 = scalar_lea.sflag [#allocation3], %s275
        %s277 = sand.u32 %s48, 1
        %s278 = smul.addr %s277, 8
        %s279 = scalar_lea.vmem [#allocation2], %s278
        // Predicated region
        $region41: #{tpu_custom_call.1} parent=39 // pred_check
          %p280 = pneg %p61
        $region42: #{tpu_custom_call.1} parent=39 // pred_check_branch
          %282 = sbr.rel (%p280) target = $region44
        $region43: #{tpu_custom_call.1} parent=39 // pred_region
          %284 = dma.done %s276, 128
        $region44: #{tpu_custom_call.1} parent=39 // pred_fallthru
          _
        %s285 = sand.u32 %s26, 1
        %s286 = scalar_lea.sflag [#allocation6], %s285
        %s287 = sand.u32 %s76, 1
        %s288 = smul.addr %s287, 8
        %s289 = scalar_lea.vmem [#allocation5], %s288
        // Predicated region
        $region45: #{tpu_custom_call.1} parent=39 // pred_check
          %p290 = pneg %p89
        $region46: #{tpu_custom_call.1} parent=39 // pred_check_branch
          %292 = sbr.rel (%p290) target = $region48
        $region47: #{tpu_custom_call.1} parent=39 // pred_region
          %294 = dma.done %s286, 128
        $region48: #{tpu_custom_call.1} parent=39 // pred_fallthru
          _
        // Predicated region
        $region49: #{tpu_custom_call.1} parent=39 // pred_check
          %p295 = pneg %p110
        $region50: #{tpu_custom_call.1} parent=39 // pred_check_branch
          %297 = sbr.rel (%p295) target = $region52
        $region51: #{tpu_custom_call.1} parent=39 // pred_region
          %299 = dma.done [#allocation6], 64
        $region52: #{tpu_custom_call.1} parent=39 // pred_fallthru
          _
        // Predicated region
        $region53: #{tpu_custom_call.1} parent=39 // pred_check
          %p300 = pneg %p131
        $region54: #{tpu_custom_call.1} parent=39 // pred_check_branch
          %302 = sbr.rel (%p300) target = $region56
        $region55: #{tpu_custom_call.1} parent=39 // pred_region
          %304 = dma.done [#allocation9], 2048
        $region56: #{tpu_custom_call.1} parent=39 // pred_fallthru
          _
        %s305 = sand.u32 %s48, 1
        %s306 = scalar_lea.sflag [#allocation3], %s305
        %s307 = sand.u32 %s48, 1
        %s308 = smul.addr %s307, 8
        %s309 = scalar_lea.vmem [#allocation2], %s308
        %p310 = pneg %p61
        %p311 = pneg %p58
        %s312 = sand.u32 %s26, 1
        %s313 = scalar_lea.sflag [#allocation6], %s312
        %s314 = sand.u32 %s76, 1
        %s315 = smul.addr %s314, 8
        %s316 = scalar_lea.vmem [#allocation5], %s315
        %p317 = pneg %p89
        %p318 = pneg %p86
        %p319 = pneg %p110
        %p320 = pneg %p107
        %p321 = pneg %p131
        %p322 = pneg %p128
        %p323 = pneg %p152
        %p324 = pneg %p149
        %p325 = pneg %p180
        %p326 = pneg %p177
        %s327 = sand.u32 %s167, 1
        %s328 = scalar_lea.sflag [#allocation4], %s327
        %s329 = sand.u32 %s167, 1
        %s330 = smul.addr %s329, 8
        %s331 = scalar_lea.vmem [#allocation10], %s330
        %v332 = vld [vmem:[%s279] sm:$0xff]
        %v333 = vld [vmem:[%s289] sm:$0xff]
        %v334 = vld [vmem:[#allocation7] sm:$0x7]
        %v335 = vperm.slane %v334, 2
        %v336 = vmul.f32 %v332, %v335
        %v337 = vperm.slane %v334, 0
        %v338 = vmul.f32 %v333, %v337
        %v339 = vmul.f32 %v332, %v337
        %vm342 = vcmask 1041408
        %v343 = vrot.slane %v338, 6
        %v344 = vrot.slane %v339, 6
        %v345 = vsel %vm342, %v343, %v344
        %v347 = vadd.f32 %v336, %v345
        %v348 = vperm.slane %v334, 1
        %v349 = vmul.f32 %v333, %v348
        %v350 = vmul.f32 %v332, %v348
        %vm353 = vcmask 1040384
        %v354 = vrot.slane %v349, 7
        %v355 = vrot.slane %v350, 7
        %v356 = vsel %vm353, %v354, %v355
        %v358 = vadd.f32 %v347, %v356
        %v359 = vld [vmem:[#allocation8] sm:$0xff]
        %v360 = vld [vmem:[#allocation8 + $0x8] sm:$0xff]
        %v361 = vld [vmem:[#allocation8 + $0x10] sm:$0xff]
        %v362 = vld [vmem:[#allocation8 + $0x18] sm:$0xff]
        %v363 = vld [vmem:[#allocation8 + $0x20] sm:$0xff]
        %v364 = vld [vmem:[#allocation8 + $0x28] sm:$0xff]
        %v365 = vld [vmem:[#allocation8 + $0x30] sm:$0xff]
        %v366 = vld [vmem:[#allocation8 + $0x38] sm:$0xff]
        %v367 = vld [vmem:[#allocation8 + $0x40] sm:$0xff]
        %v368 = vld [vmem:[#allocation8 + $0x48] sm:$0xff]
        %v369 = vld [vmem:[#allocation8 + $0x50] sm:$0xff]
        %v370 = vld [vmem:[#allocation8 + $0x58] sm:$0xff]
        %v371 = vld [vmem:[#allocation8 + $0x60] sm:$0xff]
        %v372 = vld [vmem:[#allocation8 + $0x68] sm:$0xff]
        %v373 = vld [vmem:[#allocation8 + $0x70] sm:$0xff]
        %v374 = vld [vmem:[#allocation8 + $0x78] sm:$0xff]
        %v375 = vld [vmem:[%s4] sm:$0x1]
        %v377 = vperm.slane %v375, 0
        %379 = vmatpush.msra.mxu0 %v374
        %380 = vmatpush.msra.mxu0 %v373
        %381 = vmatpush.msra.mxu0 %v372
        %382 = vmatpush.msra.mxu0 %v371
        %383 = vmatpush.msra.mxu0 %v370
        %384 = vmatpush.msra.mxu0 %v369
        %385 = vmatpush.msra.mxu0 %v368
        %386 = vmatpush.msra.mxu0 %v367
        %387 = vmatpush.msra.mxu0 %v366
        %388 = vmatpush.msra.mxu0 %v365
        %389 = vmatpush.msra.mxu0 %v364
        %390 = vmatpush.msra.mxu0 %v363
        %391 = vmatpush.msra.mxu0 %v362
        %392 = vmatpush.msra.mxu0 %v361
        %393 = vmatpush.msra.mxu0 %v360
        %394 = vmatpush.msra.mxu0 %v359
        %395 = vmatmul.f32.gmra.mxu0 %v358
        %v396 = vpop.f32.mrf.mxu0
        %v397 = vadd.f32 %v377, %v396
        %398 = vdwg.mxu0
        %399 = vst [vmem:[%s331] sm:$0xff] %v397
        %s400 = sand.u32 %s167, 1
        %s401 = scalar_lea.sflag [#allocation4], %s400
        %s402 = sand.u32 %s167, 1
        %s403 = smul.addr %s402, 8
        %s404 = scalar_lea.vmem [#allocation10], %s403
        // Predicated region
        $region57: #{tpu_custom_call.1} parent=39 // pred_check
          %p405 = pneg %p177
        $region58: #{tpu_custom_call.1} parent=39 // pred_check_branch
          %407 = sbr.rel (%p405) target = $region60
        $region59: #{tpu_custom_call.1} parent=39 // pred_region
          %409 = vsyncadd %s401, 0
          %s410 = sadd.s32 %s31, %s30
          %s411 = smul.addr %s410, 8
          %s412 = scalar_lea.hbm %s5, %s411
          %s414 = sshll.u32 %s404, 4
          %s415 = int_to_ptr.vmem [resolvable:$true] %s414
          %s416 = sshll.u32 %s412, 4
          %s417 = int_to_ptr.hbm [resolvable:$true] %s416
          %419 = dma.vmem_to_hbm [thread:$0]  %s415, 128, %s417, %s401
        $region60: #{tpu_custom_call.1} parent=39 // pred_fallthru
          _
      $region40: #{tpu_custom_call.1} parent=5 // pred_fallthru
        _
      %p420 = scmp.le.s32.totalorder 2, %s21
      // Predicated region
      $region61: #{tpu_custom_call.1} parent=5 // pred_check
        %p421 = pneg %p420
      $region62: #{tpu_custom_call.1} parent=5 // pred_check_branch
        %423 = sbr.rel (%p421) target = $region64
      $region63: #{tpu_custom_call.1} parent=5 // pred_region
        %s424 = ssub.s32 %s21, 2
        // Predicated region
        $region65: #{tpu_custom_call.1} parent=63 // pred_check
          %p425 = pneg %p183
        $region66: #{tpu_custom_call.1} parent=63 // pred_check_branch
          %427 = sbr.rel (%p425) target = $region68
        $region67: #{tpu_custom_call.1} parent=63 // pred_region
          %s428 = sand.u32 %s168, 1
          %s429 = scalar_lea.sflag [#allocation4], %s428
          %s430 = sand.u32 %s168, 1
          %s431 = smul.addr %s430, 8
          %s432 = scalar_lea.vmem [#allocation10], %s431
          %434 = dma.done %s429, 128
        $region68: #{tpu_custom_call.1} parent=63 // pred_fallthru
          _
      $region64: #{tpu_custom_call.1} parent=5 // pred_fallthru
        _
    $region6: #{tpu_custom_call.1} parent=1 // loop_footer
      %s25 = sadd.s32 1, %s21
    $region7: #{tpu_custom_call.1} parent=1 // loop_footer_branch
      %20 = sbr.rel target = $region3
    $region8: #{tpu_custom_call.1} parent=1 // loop_exit
      _
    %435 = vsyncpa [#allocation3], 1
    %s436 = scalar_lea.sflag [#allocation3], 1
    %437 = vsyncpa %s436, 1
    %438 = vsyncpa [#allocation6], 1
    %s439 = scalar_lea.sflag [#allocation6], 1
    %440 = vsyncpa %s439, 1
    %441 = vsyncpa [#allocation9], 1
    %442 = vsyncpa [#allocation4], 1
    %s443 = scalar_lea.sflag [#allocation4], 1
    %444 = vsyncpa %s443, 1

// kernel: tpu_custom_call.1
$region0: #{tpu_custom_call.1}
  #allocation0 [shape = 'u32[]', space=smem, size = 0x4, offset = 0x4, fixed_abs, tag = 'smem constant byte address 0x4 - core index']
  #allocation1 [shape = 'u32[72,128]{1,0:T(1,128)}', space=vmem, size = 0x9000, scoped, tag = 'internal scratch']
  %s0 = inlined_call_operand.hbm [shape: f32[2,8,128], index: 0, kind: input, shape index: {}]
  %s1 = inlined_call_operand.hbm [shape: f32[2,1,8,128], index: 1, kind: input, shape index: {}]
  %s2 = inlined_call_operand.hbm [shape: f32[3,128], index: 2, kind: input, shape index: {}]
  %s3 = inlined_call_operand.hbm [shape: f32[128,128], index: 3, kind: input, shape index: {}]
  %s4 = inlined_call_operand.vmem [shape: f32[1,128], index: 4, kind: input, shape index: {}]
  %s5 = inlined_call_operand.hbm [shape: f32[2,8,128], index: 5, kind: output, shape index: {}]
  %s6 = sld [smem:[#allocation0]]
  $region69: #{tpu_custom_call.1} parent=0
    _
  %s8 = ssub.s32 1, %s6
  %s9 = scalar_select 0, %s8, %s6
  $region1: #{tpu_custom_call.1} parent=0
    #allocation2 [shape = 'u8[8192]{0}', space=vmem, size = 0x2000, scoped, tag = 'input window, operand 0']
    #allocation3 [shape = 's32[2]{0}', space=sflag, size = 0x8, scoped, tag = 'scoped memory for tpu_custom_call.1']
    #allocation4 [shape = 's32[2]{0}', space=sflag, size = 0x8, scoped, tag = 'scoped memory for tpu_custom_call.1']
    #allocation5 [shape = 'u8[8192]{0}', space=vmem, size = 0x2000, scoped, tag = 'input window, operand 1']
    #allocation6 [shape = 's32[2]{0}', space=sflag, size = 0x8, scoped, tag = 'scoped memory for tpu_custom_call.1']
    #allocation7 [shape = 'u8[2048]{0}', space=vmem, size = 0x800, scoped, tag = 'input window, operand 2, single buffered']
    #allocation8 [shape = 'u8[65536]{0}', space=vmem, size = 0x10000, scoped, tag = 'input window, operand 3, single buffered']
    #allocation9 [shape = 's32[1]{0}', space=sflag, size = 0x4, scoped, tag = 'scoped memory for tpu_custom_call.1']
    #allocation10 [shape = 'u8[8192]{0}', space=vmem, size = 0x2000, scoped, tag = 'output window, operand 0']
    %10 = vsyncpa [#allocation3], 0
    %s11 = scalar_lea.sflag [#allocation3], 1
    %12 = vsyncpa %s11, 0
    %13 = vsyncpa [#allocation6], 0
    %s14 = scalar_lea.sflag [#allocation6], 1
    %15 = vsyncpa %s14, 0
    %16 = vsyncpa [#allocation9], 0
    %17 = vsyncpa [#allocation4], 0
    %s18 = scalar_lea.sflag [#allocation4], 1
    %19 = vsyncpa %s18, 0
    loop: start=0, step=1, limit=4
    $region2: #{tpu_custom_call.1} parent=1 // loop_pre_header
      _
    $region3: #{tpu_custom_call.1} parent=1 // loop_header
      %s21 = sphi 0, %s25
      %p22 = scmp.ge.s32.totalorder %s21, 4
      %s28 = sphi 0, %s40
      %s29 = sphi 0, %s36
      %s30 = sphi 0, %s28
      %s31 = sphi 0, %s29
      %s32 = sphi 0, %s30
      %s33 = sphi 0, %s31
      %s45 = sphi 0, %s47
      %s48 = sphi 0, %s45
      %s49 = sphi 0, %s48
      %s65 = sphi 0, %s49
      %s73 = sphi 0, %s75
      %s76 = sphi 0, %s73
      %s77 = sphi 0, %s76
      %s93 = sphi 0, %s77
      %s97 = sphi 0, %s97
      %s99 = sphi 0, %s97
      %s100 = sphi 0, %s99
      %s114 = sphi 0, %s100
      %s118 = sphi 0, %s118
      %s120 = sphi 0, %s118
      %s121 = sphi 0, %s120
      %s135 = sphi 0, %s121
      %s139 = sphi 0, %s139
      %s141 = sphi 0, %s139
      %s142 = sphi 0, %s141
      %s156 = sphi 0, %s142
      %s164 = sphi 0, %s166
      %s167 = sphi 0, %s164
      %s168 = sphi 0, %s167
      %s184 = sphi 0, %s168
    $region4: #{tpu_custom_call.1} parent=1 // loop_header_branch
      %24 = sbr.rel (%p22) target = $region8
    $region5: #{tpu_custom_call.1} parent=1 // loop_body
      %s26 = ssub.s32 %s21, 1
      %s27 = ssub.s32 %s21, 2
      %s34 = sadd.s32 1, %s29
      %p35 = scmp.ge.s32.totalorder %s34, 1
      %s36 = scalar_select %p35, 0, %s34
      %s37 = sadd.s32 1, %s28
      %s38 = scalar_select %p35, %s37, %s28
      %p39 = scmp.ge.s32.totalorder %s38, 2
      %s40 = scalar_select %p39, 0, %s38
      %s41 = ssub.s32 %s28, %s40
      %s42 = ssub.s32 %s29, %s36
      %s43 = sor.u32 %s41, %s42
      %p44 = scmp.eq.s32.totalorder %s43, 0
      %s46 = sadd.s32 %s45, 1
      %s47 = scalar_select %p44, %s45, %s46
      %p50 = pneg %p44
      %p51 = scmp.eq.s32.totalorder %s21, 1
      %p52 = por %p50, %p51
      %p53 = scmp.ne.s32.totalorder %s45, %s48
      %p54 = scmp.eq.s32.totalorder %s21, 0
      %p55 = por %p53, %p54
      %p56 = scmp.ne.s32.totalorder %s45, %s48
      %p57 = scmp.eq.s32.totalorder %s26, 1
      %p58 = por %p56, %p57
      %p59 = scmp.ne.s32.totalorder %s48, %s49
      %p60 = scmp.eq.s32.totalorder %s26, 0
      %p61 = por %p59, %p60
      %p62 = scmp.ne.s32.totalorder %s48, %s49
      %p63 = scmp.eq.s32.totalorder %s27, 1
      %p64 = por %p62, %p63
      %p66 = scmp.ne.s32.totalorder %s49, %s65
      %p67 = scmp.eq.s32.totalorder %s27, 0
      %p68 = por %p66, %p67
      %s69 = ssub.s32 %s28, %s40
      %s70 = ssub.s32 %s29, %s36
      %s71 = sor.u32 %s69, %s70
      %p72 = scmp.eq.s32.totalorder %s71, 0
      %s74 = sadd.s32 %s73, 1
      %s75 = scalar_select %p72, %s73, %s74
      %p78 = pneg %p72
      %p79 = scmp.eq.s32.totalorder %s21, 1
      %p80 = por %p78, %p79
      %p81 = scmp.ne.s32.totalorder %s73, %s76
      %p82 = scmp.eq.s32.totalorder %s21, 0
      %p83 = por %p81, %p82
      %p84 = scmp.ne.s32.totalorder %s73, %s76
      %p85 = scmp.eq.s32.totalorder %s26, 1
      %p86 = por %p84, %p85
      %p87 = scmp.ne.s32.totalorder %s76, %s77
      %p88 = scmp.eq.s32.totalorder %s26, 0
      %p89 = por %p87, %p88
      %p90 = scmp.ne.s32.totalorder %s76, %s77
      %p91 = scmp.eq.s32.totalorder %s27, 1
      %p92 = por %p90, %p91
      %p94 = scmp.ne.s32.totalorder %s77, %s93
      %p95 = scmp.eq.s32.totalorder %s27, 0
      %p96 = por %p94, %p95
      %s98 = sadd.s32 %s97, 1
      %p101 = scmp.eq.s32.totalorder %s21, 1
      %p102 = scmp.ne.s32.totalorder %s97, %s99
      %p103 = scmp.eq.s32.totalorder %s21, 0
      %p104 = por %p102, %p103
      %p105 = scmp.ne.s32.totalorder %s97, %s99
      %p106 = scmp.eq.s32.totalorder %s26, 1
      %p107 = por %p105, %p106
      %p108 = scmp.ne.s32.totalorder %s99, %s100
      %p109 = scmp.eq.s32.totalorder %s26, 0
      %p110 = por %p108, %p109
      %p111 = scmp.ne.s32.totalorder %s99, %s100
      %p112 = scmp.eq.s32.totalorder %s27, 1
      %p113 = por %p111, %p112
      %p115 = scmp.ne.s32.totalorder %s100, %s114
      %p116 = scmp.eq.s32.totalorder %s27, 0
      %p117 = por %p115, %p116
      %s119 = sadd.s32 %s118, 1
      %p122 = scmp.eq.s32.totalorder %s21, 1
      %p123 = scmp.ne.s32.totalorder %s118, %s120
      %p124 = scmp.eq.s32.totalorder %s21, 0
      %p125 = por %p123, %p124
      %p126 = scmp.ne.s32.totalorder %s118, %s120
      %p127 = scmp.eq.s32.totalorder %s26, 1
      %p128 = por %p126, %p127
      %p129 = scmp.ne.s32.totalorder %s120, %s121
      %p130 = scmp.eq.s32.totalorder %s26, 0
      %p131 = por %p129, %p130
      %p132 = scmp.ne.s32.totalorder %s120, %s121
      %p133 = scmp.eq.s32.totalorder %s27, 1
      %p134 = por %p132, %p133
      %p136 = scmp.ne.s32.totalorder %s121, %s135
      %p137 = scmp.eq.s32.totalorder %s27, 0
      %p138 = por %p136, %p137
      %s140 = sadd.s32 %s139, 1
      %p143 = scmp.eq.s32.totalorder %s21, 1
      %p144 = scmp.ne.s32.totalorder %s139, %s141
      %p145 = scmp.eq.s32.totalorder %s21, 0
      %p146 = por %p144, %p145
      %p147 = scmp.ne.s32.totalorder %s139, %s141
      %p148 = scmp.eq.s32.totalorder %s26, 1
      %p149 = por %p147, %p148
      %p150 = scmp.ne.s32.totalorder %s141, %s142
      %p151 = scmp.eq.s32.totalorder %s26, 0
      %p152 = por %p150, %p151
      %p153 = scmp.ne.s32.totalorder %s141, %s142
      %p154 = scmp.eq.s32.totalorder %s27, 1
      %p155 = por %p153, %p154
      %p157 = scmp.ne.s32.totalorder %s142, %s156
      %p158 = scmp.eq.s32.totalorder %s27, 0
      %p159 = por %p157, %p158
      %s160 = ssub.s32 %s28, %s40
      %s161 = ssub.s32 %s29, %s36
      %s162 = sor.u32 %s160, %s161
      %p163 = scmp.eq.s32.totalorder %s162, 0
      %s165 = sadd.s32 %s164, 1
      %s166 = scalar_select %p163, %s164, %s165
      %p169 = pneg %p163
      %p170 = scmp.eq.s32.totalorder %s21, 1
      %p171 = por %p169, %p170
      %p172 = scmp.ne.s32.totalorder %s164, %s167
      %p173 = scmp.eq.s32.totalorder %s21, 0
      %p174 = por %p172, %p173
      %p175 = scmp.ne.s32.totalorder %s164, %s167
      %p176 = scmp.eq.s32.totalorder %s26, 1
      %p177 = por %p175, %p176
      %p178 = scmp.ne.s32.totalorder %s167, %s168
      %p179 = scmp.eq.s32.totalorder %s26, 0
      %p180 = por %p178, %p179
      %p181 = scmp.ne.s32.totalorder %s167, %s168
      %p182 = scmp.eq.s32.totalorder %s27, 1
      %p183 = por %p181, %p182
      %p185 = scmp.ne.s32.totalorder %s168, %s184
      %p186 = scmp.eq.s32.totalorder %s27, 0
      %p187 = por %p185, %p186
      %p188 = scmp.le.s32.totalorder 1, %s21
      %p189 = scmp.lt.s32.totalorder %s21, 3
      %p190 = pnand %p188, %p189
      %p191 = pneg %p190
      // Predicated region
      $region9: #{tpu_custom_call.1} parent=5 // pred_check
        _
      $region10: #{tpu_custom_call.1} parent=5 // pred_check_branch
        %193 = sbr.rel (%p190) target = $region12
      $region11: #{tpu_custom_call.1} parent=5 // pred_region
        %s194 = ssub.s32 %s21, 1
        // Predicated region
        $region13: #{tpu_custom_call.1} parent=11 // pred_check
          %p195 = pneg %p110
        $region14: #{tpu_custom_call.1} parent=11 // pred_check_branch
          %197 = sbr.rel (%p195) target = $region16
        $region15: #{tpu_custom_call.1} parent=11 // pred_region
          %199 = vsyncadd [#allocation6], 0
          %s201 = sshll.u32 %s2, 4
          %s202 = int_to_ptr.hbm [resolvable:$true] %s201
          %s203 = sshll.u32 [#allocation7], 4
          %s204 = int_to_ptr.vmem [resolvable:$true] %s203
          %206 = dma.hbm_to_vmem [thread:$0]  %s202, 64, %s204, [#allocation6]
        $region16: #{tpu_custom_call.1} parent=11 // pred_fallthru
          _
        // Predicated region
        $region17: #{tpu_custom_call.1} parent=11 // pred_check
          %p207 = pneg %p131
        $region18: #{tpu_custom_call.1} parent=11 // pred_check_branch
          %209 = sbr.rel (%p207) target = $region20
        $region19: #{tpu_custom_call.1} parent=11 // pred_region
          %211 = vsyncadd [#allocation9], 0
          %s212 = sshll.u32 %s3, 4
          %s213 = int_to_ptr.hbm [resolvable:$true] %s212
          %s214 = sshll.u32 [#allocation8], 4
          %s215 = int_to_ptr.vmem [resolvable:$true] %s214
          %220 = dma.hbm_to_vmem [thread:$0]  %s213, 2048, %s215, [#allocation9], 128, 128, 8
        $region20: #{tpu_custom_call.1} parent=11 // pred_fallthru
          _
        // Predicated region
        $region21: #{tpu_custom_call.1} parent=11 // pred_check
          %p221 = pneg %p152
        $region22: #{tpu_custom_call.1} parent=11 // pred_check_branch
          %223 = sbr.rel (%p221) target = $region24
        $region23: #{tpu_custom_call.1} parent=11 // pred_region
          _
        $region24: #{tpu_custom_call.1} parent=11 // pred_fallthru
          _
      $region12: #{tpu_custom_call.1} parent=5 // pred_fallthru
        _
      %p224 = scmp.lt.s32.totalorder %s21, 2
      // Predicated region
      $region25: #{tpu_custom_call.1} parent=5 // pred_check
        %p225 = pneg %p224
      $region26: #{tpu_custom_call.1} parent=5 // pred_check_branch
        %227 = sbr.rel (%p225) target = $region28
      $region27: #{tpu_custom_call.1} parent=5 // pred_region
        // Predicated region
        $region29: #{tpu_custom_call.1} parent=27 // pred_check
          %p228 = pneg %p55
        $region30: #{tpu_custom_call.1} parent=27 // pred_check_branch
          %230 = sbr.rel (%p228) target = $region32
        $region31: #{tpu_custom_call.1} parent=27 // pred_region
          %s231 = sand.u32 %s45, 1
          %s232 = scalar_lea.sflag [#allocation3], %s231
          %s233 = sand.u32 %s45, 1
          %s234 = smul.addr %s233, 8
          %s235 = scalar_lea.vmem [#allocation2], %s234
          %237 = vsyncadd %s232, 0
          %s238 = sadd.s32 %s29, %s28
          %s239 = smul.addr %s238, 8
          %s240 = scalar_lea.hbm %s0, %s239
          %s242 = sshll.u32 %s240, 4
          %s243 = int_to_ptr.hbm [resolvable:$true] %s242
          %s244 = sshll.u32 %s235, 4
          %s245 = int_to_ptr.vmem [resolvable:$true] %s244
          %247 = dma.hbm_to_vmem [thread:$0]  %s243, 128, %s245, %s232
        $region32: #{tpu_custom_call.1} parent=27 // pred_fallthru
          _
        // Predicated region
        $region33: #{tpu_custom_call.1} parent=27 // pred_check
          %p248 = pneg %p83
        $region34: #{tpu_custom_call.1} parent=27 // pred_check_branch
          %250 = sbr.rel (%p248) target = $region36
        $region35: #{tpu_custom_call.1} parent=27 // pred_region
          %s251 = sand.u32 %s21, 1
          %s252 = scalar_lea.sflag [#allocation6], %s251
          %s253 = sand.u32 %s73, 1
          %s254 = smul.addr %s253, 8
          %s255 = scalar_lea.vmem [#allocation5], %s254
          %257 = vsyncadd %s252, 0
          %s258 = sadd.s32 %s29, %s28
          %s259 = smul.addr %s258, 8
          %s260 = scalar_lea.hbm %s1, %s259
          %s262 = sshll.u32 %s260, 4
          %s263 = int_to_ptr.hbm [resolvable:$true] %s262
          %s264 = sshll.u32 %s255, 4
          %s265 = int_to_ptr.vmem [resolvable:$true] %s264
          %267 = dma.hbm_to_vmem [thread:$0]  %s263, 128, %s265, %s252
        $region36: #{tpu_custom_call.1} parent=27 // pred_fallthru
          _
      $region28: #{tpu_custom_call.1} parent=5 // pred_fallthru
        _
      %p268 = scmp.le.s32.totalorder 1, %s21
      %p269 = scmp.lt.s32.totalorder %s21, 3
      %p270 = pnand %p268, %p269
      %p271 = pneg %p270
      // Predicated region
      $region37: #{tpu_custom_call.1} parent=5 // pred_check
        _
      $region38: #{tpu_custom_call.1} parent=5 // pred_check_branch
        %273 = sbr.rel (%p270) target = $region40
      $region39: #{tpu_custom_call.1} parent=5 // pred_region
        %s274 = ssub.s32 %s21, 1
        %s275 = sand.u32 %s48, 1
        %s276 = scalar_lea.sflag [#allocation3], %s275
        %s277 = sand.u32 %s48, 1
        %s278 = smul.addr %s277, 8
        %s279 = scalar_lea.vmem [#allocation2], %s278
        // Predicated region
        $region41: #{tpu_custom_call.1} parent=39 // pred_check
          %p280 = pneg %p61
        $region42: #{tpu_custom_call.1} parent=39 // pred_check_branch
          %282 = sbr.rel (%p280) target = $region44
        $region43: #{tpu_custom_call.1} parent=39 // pred_region
          %284 = dma.done %s276, 128
        $region44: #{tpu_custom_call.1} parent=39 // pred_fallthru
          _
        %s285 = sand.u32 %s26, 1
        %s286 = scalar_lea.sflag [#allocation6], %s285
        %s287 = sand.u32 %s76, 1
        %s288 = smul.addr %s287, 8
        %s289 = scalar_lea.vmem [#allocation5], %s288
        // Predicated region
        $region45: #{tpu_custom_call.1} parent=39 // pred_check
          %p290 = pneg %p89
        $region46: #{tpu_custom_call.1} parent=39 // pred_check_branch
          %292 = sbr.rel (%p290) target = $region48
        $region47: #{tpu_custom_call.1} parent=39 // pred_region
          %294 = dma.done %s286, 128
        $region48: #{tpu_custom_call.1} parent=39 // pred_fallthru
          _
        // Predicated region
        $region49: #{tpu_custom_call.1} parent=39 // pred_check
          %p295 = pneg %p110
        $region50: #{tpu_custom_call.1} parent=39 // pred_check_branch
          %297 = sbr.rel (%p295) target = $region52
        $region51: #{tpu_custom_call.1} parent=39 // pred_region
          %299 = dma.done [#allocation6], 64
        $region52: #{tpu_custom_call.1} parent=39 // pred_fallthru
          _
        // Predicated region
        $region53: #{tpu_custom_call.1} parent=39 // pred_check
          %p300 = pneg %p131
        $region54: #{tpu_custom_call.1} parent=39 // pred_check_branch
          %302 = sbr.rel (%p300) target = $region56
        $region55: #{tpu_custom_call.1} parent=39 // pred_region
          %304 = dma.done [#allocation9], 2048
        $region56: #{tpu_custom_call.1} parent=39 // pred_fallthru
          _
        %s305 = sand.u32 %s48, 1
        %s306 = scalar_lea.sflag [#allocation3], %s305
        %s307 = sand.u32 %s48, 1
        %s308 = smul.addr %s307, 8
        %s309 = scalar_lea.vmem [#allocation2], %s308
        %p310 = pneg %p61
        %p311 = pneg %p58
        %s312 = sand.u32 %s26, 1
        %s313 = scalar_lea.sflag [#allocation6], %s312
        %s314 = sand.u32 %s76, 1
        %s315 = smul.addr %s314, 8
        %s316 = scalar_lea.vmem [#allocation5], %s315
        %p317 = pneg %p89
        %p318 = pneg %p86
        %p319 = pneg %p110
        %p320 = pneg %p107
        %p321 = pneg %p131
        %p322 = pneg %p128
        %p323 = pneg %p152
        %p324 = pneg %p149
        %p325 = pneg %p180
        %p326 = pneg %p177
        %s327 = sand.u32 %s167, 1
        %s328 = scalar_lea.sflag [#allocation4], %s327
        %s329 = sand.u32 %s167, 1
        %s330 = smul.addr %s329, 8
        %s331 = scalar_lea.vmem [#allocation10], %s330
        %v332 = vld [vmem:[%s279] sm:$0xff]
        %v333 = vld [vmem:[%s289] sm:$0xff]
        %v334 = vld [vmem:[#allocation7] sm:$0x7]
        %v335 = vperm.slane %v334, 2
        %v336 = vmul.f32 %v332, %v335
        %v337 = vperm.slane %v334, 0
        %v338 = vmul.f32 %v333, %v337
        %v339 = vmul.f32 %v332, %v337
        %vm342 = vcmask 1041408
        %v343 = vrot.slane %v338, 6
        %v344 = vrot.slane %v339, 6
        %v345 = vsel %vm342, %v343, %v344
        %v347 = vadd.f32 %v336, %v345
        %v348 = vperm.slane %v334, 1
        %v349 = vmul.f32 %v333, %v348
        %v350 = vmul.f32 %v332, %v348
        %vm353 = vcmask 1040384
        %v354 = vrot.slane %v349, 7
        %v355 = vrot.slane %v350, 7
        %v356 = vsel %vm353, %v354, %v355
        %v358 = vadd.f32 %v347, %v356
        %v359 = vld [vmem:[#allocation8] sm:$0xff]
        %v360 = vld [vmem:[#allocation8 + $0x8] sm:$0xff]
        %v361 = vld [vmem:[#allocation8 + $0x10] sm:$0xff]
        %v362 = vld [vmem:[#allocation8 + $0x18] sm:$0xff]
        %v363 = vld [vmem:[#allocation8 + $0x20] sm:$0xff]
        %v364 = vld [vmem:[#allocation8 + $0x28] sm:$0xff]
        %v365 = vld [vmem:[#allocation8 + $0x30] sm:$0xff]
        %v366 = vld [vmem:[#allocation8 + $0x38] sm:$0xff]
        %v367 = vld [vmem:[#allocation8 + $0x40] sm:$0xff]
        %v368 = vld [vmem:[#allocation8 + $0x48] sm:$0xff]
        %v369 = vld [vmem:[#allocation8 + $0x50] sm:$0xff]
        %v370 = vld [vmem:[#allocation8 + $0x58] sm:$0xff]
        %v371 = vld [vmem:[#allocation8 + $0x60] sm:$0xff]
        %v372 = vld [vmem:[#allocation8 + $0x68] sm:$0xff]
        %v373 = vld [vmem:[#allocation8 + $0x70] sm:$0xff]
        %v374 = vld [vmem:[#allocation8 + $0x78] sm:$0xff]
        %v375 = vld [vmem:[%s4] sm:$0x1]
        %v377 = vperm.slane %v375, 0
        %379 = vmatpush.msra.mxu0 %v374
        %380 = vmatpush.msra.mxu0 %v373
        %381 = vmatpush.msra.mxu0 %v372
        %382 = vmatpush.msra.mxu0 %v371
        %383 = vmatpush.msra.mxu0 %v370
        %384 = vmatpush.msra.mxu0 %v369
        %385 = vmatpush.msra.mxu0 %v368
        %386 = vmatpush.msra.mxu0 %v367
        %387 = vmatpush.msra.mxu0 %v366
        %388 = vmatpush.msra.mxu0 %v365
        %389 = vmatpush.msra.mxu0 %v364
        %390 = vmatpush.msra.mxu0 %v363
        %391 = vmatpush.msra.mxu0 %v362
        %392 = vmatpush.msra.mxu0 %v361
        %393 = vmatpush.msra.mxu0 %v360
        %394 = vmatpush.msra.mxu0 %v359
        %395 = vmatmul.f32.gmra.mxu0 %v358
        %v396 = vpop.f32.mrf.mxu0
        %v397 = vadd.f32 %v377, %v396
        %398 = vdwg.mxu0
        %399 = vst [vmem:[%s331] sm:$0xff] %v397
        %s400 = sand.u32 %s167, 1
        %s401 = scalar_lea.sflag [#allocation4], %s400
        %s402 = sand.u32 %s167, 1
        %s403 = smul.addr %s402, 8
        %s404 = scalar_lea.vmem [#allocation10], %s403
        // Predicated region
        $region57: #{tpu_custom_call.1} parent=39 // pred_check
          %p405 = pneg %p177
        $region58: #{tpu_custom_call.1} parent=39 // pred_check_branch
          %407 = sbr.rel (%p405) target = $region60
        $region59: #{tpu_custom_call.1} parent=39 // pred_region
          %409 = vsyncadd %s401, 0
          %s410 = sadd.s32 %s31, %s30
          %s411 = smul.addr %s410, 8
          %s412 = scalar_lea.hbm %s5, %s411
          %s414 = sshll.u32 %s404, 4
          %s415 = int_to_ptr.vmem [resolvable:$true] %s414
          %s416 = sshll.u32 %s412, 4
          %s417 = int_to_ptr.hbm [resolvable:$true] %s416
          %419 = dma.vmem_to_hbm [thread:$0]  %s415, 128, %s417, %s401
        $region60: #{tpu_custom_call.1} parent=39 // pred_fallthru
          _
      $region40: #{tpu_custom_call.1} parent=5 // pred_fallthru
        _
      %p420 = scmp.le.s32.totalorder 2, %s21
      // Predicated region
      $region61: #{tpu_custom_call.1} parent=5 // pred_check
        %p421 = pneg %p420
      $region62: #{tpu_custom_call.1} parent=5 // pred_check_branch
        %423 = sbr.rel (%p421) target = $region64
      $region63: #{tpu_custom_call.1} parent=5 // pred_region
        %s424 = ssub.s32 %s21, 2
        // Predicated region
        $region65: #{tpu_custom_call.1} parent=63 // pred_check
          %p425 = pneg %p183
        $region66: #{tpu_custom_call.1} parent=63 // pred_check_branch
          %427 = sbr.rel (%p425) target = $region68
        $region67: #{tpu_custom_call.1} parent=63 // pred_region
          %s428 = sand.u32 %s168, 1
          %s429 = scalar_lea.sflag [#allocation4], %s428
          %s430 = sand.u32 %s168, 1
          %s431 = smul.addr %s430, 8
          %s432 = scalar_lea.vmem [#allocation10], %s431
          %434 = dma.done %s429, 128
        $region68: #{tpu_custom_call.1} parent=63 // pred_fallthru
          _
      $region64: #{tpu_custom_call.1} parent=5 // pred_fallthru
        _
    $region6: #{tpu_custom_call.1} parent=1 // loop_footer
      %s25 = sadd.s32 1, %s21
    $region7: #{tpu_custom_call.1} parent=1 // loop_footer_branch
      %20 = sbr.rel target = $region3
    $region8: #{tpu_custom_call.1} parent=1 // loop_exit
      _
    %435 = vsyncpa [#allocation3], 1
    %s436 = scalar_lea.sflag [#allocation3], 1
    %437 = vsyncpa %s436, 1
    %438 = vsyncpa [#allocation6], 1
    %s439 = scalar_lea.sflag [#allocation6], 1
    %440 = vsyncpa %s439, 1
    %441 = vsyncpa [#allocation9], 1
    %442 = vsyncpa [#allocation4], 1
    %s443 = scalar_lea.sflag [#allocation4], 1
    %444 = vsyncpa %s443, 1

</llo_original>
